<compile_context>
chip_gen: v7x
topology: tpu7x:2x2x1
jax: 0.10.0
libtpu: 0.0.40
codegen_flags: <defaults>
</compile_context>

<pallas_src>
import functools

import jax
import jax.numpy as jnp
from jax.experimental import pallas as pl
from jax.experimental.pallas import tpu as pltpu


def _round_up(x, m):
    return (x + m - 1) // m * m


def _normalize_kernel(x_ref, o_ref, *, inv_d, inv_dm1):
    # x_ref / o_ref: (r, D) tile holding r independent flattened samples.
    x = x_ref[...].astype(jnp.float32)

    # per-sample mean over the full flattened image
    mean = jnp.sum(x, axis=-1, keepdims=True) * inv_d

    # two-pass unbiased variance (torch.std default, ddof = 1); two-pass keeps
    # precision when |mean| >> std (single-pass sum/sumsq fusion left out).
    centered = x - mean
    var = jnp.sum(centered * centered, axis=-1, keepdims=True) * inv_dm1
    std = jnp.sqrt(var) + 1e-07

    # (r, 1) per-row reciprocal -> one vmul per element on the output path
    inv = pl.reciprocal(std, approx=False)

    o_ref[...] = (centered * inv).astype(o_ref.dtype)


def normalize_images(x):
    """x: (N, C, H, W) array. Returns normalized array of same shape/dtype."""
    n = x.shape[0]
    d = 1
    for s in x.shape[1:]:
        d *= s
    x_flat = x.reshape(n, d)

    itemsize = jnp.dtype(x.dtype).itemsize
    row_mult = 8 if itemsize >= 4 else (16 if itemsize == 2 else 32)

    # Per-generation VMEM capacity (v5e/v6e: 128 MiB, v7x: 64 MiB per TC).
    try:
        info = pltpu.get_tpu_info()
        vmem_cap = int(getattr(info, "vmem_capacity_bytes", 64 * 1024 * 1024))
    except Exception:  # be conservative if the query is unavailable
        vmem_cap = 64 * 1024 * 1024
    # Request ~75% of physical VMEM: real headroom for compiler scratch and
    # pipeline buffers instead of claiming the whole chip (previous bug on v7x).
    vmem_limit = max(32 * 1024 * 1024, min((vmem_cap * 3) // 4, 112 * 1024 * 1024))

    # Rows per block: fill sublanes, amortize the ~0.35 us per-grid-step
    # overhead, and keep the in-flight footprint (2x double-buffered input +
    # 2x output tiles in native dtype, plus ~2 f32 compute temps) within half
    # of the requested VMEM limit.
    tile_budget = vmem_limit // 2
    bytes_per_row = d * (4 * itemsize + 8)
    r = max(1, tile_budget // bytes_per_row)
    r_cap = 2048 if vmem_cap >= 128 * 1024 * 1024 else 1024
    r = max(row_mult, min(int(r), r_cap))
    r = (r // row_mult) * row_mult

    if n <= row_mult:
        # One (partial) block whose row count equals the full batch dim.
        r = n
    else:
        # Keep the grid at >= 2 steps so both v7x TensorCores get work.
        r = min(r, _round_up(-(-n // 2), row_mult))

    grid = (pl.cdiv(n, r),)

    # ddof=1 divisor; d == 1 matches torch (nan std) via multiplying by nan.
    inv_dm1 = (1.0 / (d - 1)) if d > 1 else float("nan")

    kernel = functools.partial(_normalize_kernel, inv_d=1.0 / d, inv_dm1=inv_dm1)

    out_flat = pl.pallas_call(
        kernel,
        out_shape=jax.ShapeDtypeStruct((n, d), x.dtype),
        grid_spec=pltpu.PrefetchScalarGridSpec(
            num_scalar_prefetch=0,
            grid=grid,
            in_specs=[pl.BlockSpec((r, d), lambda i: (i, 0))],
            out_specs=pl.BlockSpec((r, d), lambda i: (i, 0)),
        ),
        compiler_params=pltpu.CompilerParams(
            dimension_semantics=("parallel",),  # shards batch blocks across TCs on v7x
            vmem_limit_bytes=int(vmem_limit),
        ),
    )(x_flat)

    return out_flat.reshape(x.shape)


if __name__ == "__main__":
    key = jax.random.PRNGKey(0)
    x = jax.random.normal(key, (2, 4, 16, 16), dtype=jnp.float32) * 3.0 + 1.5

    out = normalize_images(x)
    jax.block_until_ready(out)

    # sanity check vs pure-JAX reference (unbiased std, eps added to std)
    flat = x.reshape(x.shape[0], -1)
    mp = jnp.mean(flat, axis=1)
    sp = jnp.std(flat, axis=1, ddof=1) + 1e-07
    ref = (x - mp[:, None, None, None]) / sp[:, None, None, None]
    assert jnp.allclose(out, ref, atol=1e-5, rtol=1e-5)

    print("KERNEL_OK")
</pallas_src>

<mosaic_0001>
module attributes {stable_mosaic.version = 11 : i64} {
  func.func @_normalize_kernel(%arg0: i32, %arg1: memref<2x1024xf32, #tpu.memory_space<vmem>>, %arg2: memref<2x1024xf32, #tpu.memory_space<vmem>>) attributes {dimension_semantics = [#tpu.dimension_semantics<parallel>], iteration_bounds = array<i64: 1>, scalar_prefetch = 0 : i64, scratch_operands = 0 : i64, tpu.core_type = #tpu.core_type<tc>, window_params = [{transform_indices = @transform_0, window_bounds = array<i64: 2, 1024>}, {transform_indices = @transform_1, window_bounds = array<i64: 2, 1024>}]} {
    %c0 = arith.constant 0 : index
    %c0_0 = arith.constant 0 : index
    %0 = vector.load %arg1[%c0, %c0_0] : memref<2x1024xf32, #tpu.memory_space<vmem>>, vector<2x1024xf32>
    %cst = arith.constant dense<0.000000e+00> : vector<2xf32>
    %1 = vector.multi_reduction <add>, %0, %cst [1] : vector<2x1024xf32> to vector<2xf32>
    %2 = vector.shape_cast %1 : vector<2xf32> to vector<2x1xf32>
    %cst_1 = arith.constant 9.765625E-4 : f32
    %3 = vector.broadcast %cst_1 : f32 to vector<2x1xf32>
    %4 = arith.mulf %2, %3 : vector<2x1xf32>
    %5 = vector.broadcast %4 : vector<2x1xf32> to vector<2x1024xf32>
    %6 = arith.subf %0, %5 : vector<2x1024xf32>
    %7 = arith.mulf %6, %6 : vector<2x1024xf32>
    %cst_2 = arith.constant dense<0.000000e+00> : vector<2xf32>
    %8 = vector.multi_reduction <add>, %7, %cst_2 [1] : vector<2x1024xf32> to vector<2xf32>
    %9 = vector.shape_cast %8 : vector<2xf32> to vector<2x1xf32>
    %cst_3 = arith.constant 9.77517105E-4 : f32
    %10 = vector.broadcast %cst_3 : f32 to vector<2x1xf32>
    %11 = arith.mulf %9, %10 : vector<2x1xf32>
    %12 = math.sqrt %11 : vector<2x1xf32>
    %cst_4 = arith.constant 1.000000e-07 : f32
    %13 = vector.broadcast %cst_4 : f32 to vector<2x1xf32>
    %14 = arith.addf %12, %13 : vector<2x1xf32>
    %15 = tpu.reciprocal %14 : vector<2x1xf32> -> vector<2x1xf32>
    %16 = vector.broadcast %15 : vector<2x1xf32> to vector<2x1024xf32>
    %17 = arith.mulf %6, %16 : vector<2x1024xf32>
    %c0_5 = arith.constant 0 : index
    %c0_6 = arith.constant 0 : index
    %18 = vector.load %arg2[%c0_5, %c0_6] : memref<2x1024xf32, #tpu.memory_space<vmem>>, vector<2x1024xf32>
    tpu.vector_store %arg2[%c0_5, %c0_6], %17 {strides = array<i32>} : memref<2x1024xf32, #tpu.memory_space<vmem>>, vector<2x1024xf32>,
    return
  }
  func.func @transform_0(%arg0: i32) -> (i32, i32) {
    %c0_i32 = arith.constant 0 : i32
    %c0_i32_0 = arith.constant 0 : i32
    return %arg0, %c0_i32 : i32, i32
  }
  func.func @transform_1(%arg0: i32) -> (i32, i32) {
    %c0_i32 = arith.constant 0 : i32
    %c0_i32_0 = arith.constant 0 : i32
    return %arg0, %c0_i32 : i32, i32
  }
}

</mosaic_0001>

<llo_original>
// kernel: tpu_custom_call.1
$region0: #{tpu_custom_call.1}
  #allocation0 [shape = 'u32[]', space=smem, size = 0x4, offset = 0x4, fixed_abs, tag = 'smem constant byte address 0x4 - core index']
  #allocation1 [shape = 'u32[144,128]{1,0:T(1,128)}', space=vmem, size = 0x12000, scoped, tag = 'internal scratch']
  %s0 = inlined_call_operand.hbm [shape: f32[2,1024], index: 0, kind: input, shape index: {}]
  %s1 = inlined_call_operand.hbm [shape: f32[2,1024], index: 1, kind: output, shape index: {}]
  %s2 = sld [smem:[#allocation0]]
  $region18: #{tpu_custom_call.1} parent=0
    _
  %s4 = ssub.s32 1, %s2
  %s5 = scalar_select 0, %s4, %s2
  $region1: #{tpu_custom_call.1} parent=0
    #allocation2 [shape = 'u8[8192]{0}', space=vmem, size = 0x2000, scoped, tag = 'input window, operand 0, single buffered']
    #allocation3 [shape = 's32[1]{0}', space=sflag, size = 0x4, scoped, tag = 'scoped memory for tpu_custom_call.1']
    #allocation4 [shape = 's32[1]{0}', space=sflag, size = 0x4, scoped, tag = 'scoped memory for tpu_custom_call.1']
    #allocation5 [shape = 'u8[8192]{0}', space=vmem, size = 0x2000, scoped, tag = 'output window, operand 0, single buffered']
    %6 = vsyncpa [#allocation3], 0
    %7 = vsyncpa [#allocation4], 0
    // Predicated region
    $region2: #{tpu_custom_call.1} parent=1 // pred_check
      _
    $region3: #{tpu_custom_call.1} parent=1 // pred_check_branch
      %9 = sbr.rel (0) target = $region5
    $region4: #{tpu_custom_call.1} parent=1 // pred_region
      %s11 = ssub.s32 256, 256
      %12 = vsyncadd [#allocation3], %s11
      %s14 = sshll.u32 [#allocation2], 4
      %s15 = int_to_ptr.vmem [resolvable:$true] %s14
      %17 = dma.hbm_to_vmem [thread:$0]  %s0, 256, %s15, [#allocation3]
    $region5: #{tpu_custom_call.1} parent=1 // pred_fallthru
      _
    // Predicated region
    $region6: #{tpu_custom_call.1} parent=1 // pred_check
      _
    $region7: #{tpu_custom_call.1} parent=1 // pred_check_branch
      %19 = sbr.rel (0) target = $region9
    $region8: #{tpu_custom_call.1} parent=1 // pred_region
      %20 = dma.done [#allocation3], 256
    $region9: #{tpu_custom_call.1} parent=1 // pred_fallthru
      _
    %v21 = vld [vmem:[#allocation2] sm:$0xff]
    %v22 = vld [vmem:[#allocation2 + $0x8] sm:$0xff]
    %v25 = vcombine.high %v21, %v21
    %v27 = vunpack.c.l.s4 1983009808
    %v28 = vunpack.c.0.s8 %v27
    %v29 = vlaneseq
    %v30 = vshrl.u32 %v29, 7
    %v31 = vsub.s32 %v28, %v30
    %v32 = vrot.slane %v21, %v31
    %v34 = vunpack.c.l.s4 1983009808
    %v35 = vunpack.c.0.s8 %v34
    %v36 = vlaneseq
    %v37 = vshrl.u32 %v36, 7
    %v38 = vsub.s32 %v35, %v37
    %v39 = vrot.slane %v25, %v38
    %v40 = vcombine.high %v32, %v32
    %v41 = vcombine.high %v39, %v39
    %v42 = vcombine.high %v22, %v22
    %v44 = vunpack.c.l.s4 1983009808
    %v45 = vunpack.c.0.s8 %v44
    %v46 = vlaneseq
    %v47 = vshrl.u32 %v46, 7
    %v48 = vsub.s32 %v45, %v47
    %v49 = vrot.slane %v22, %v48
    %v51 = vunpack.c.l.s4 1983009808
    %v52 = vunpack.c.0.s8 %v51
    %v53 = vlaneseq
    %v54 = vshrl.u32 %v53, 7
    %v55 = vsub.s32 %v52, %v54
    %v56 = vrot.slane %v42, %v55
    %v57 = vcombine.high %v49, %v49
    %v58 = vcombine.high %v56, %v56
    %vm67 = vcmask 1041408
    %v68 = vsel %vm67, %v32, 0.0
    %v69 = vsel %vm67, %v40, 0.0
    %v70 = vadd.f32 %v68, %v69
    %v71 = vsel %vm67, %v39, 0.0
    %v72 = vadd.f32 %v70, %v71
    %v73 = vsel %vm67, %v41, 0.0
    %v74 = vadd.f32 %v72, %v73
    %v75 = vsel %vm67, %v49, 0.0
    %v76 = vadd.f32 %v74, %v75
    %v77 = vsel %vm67, %v57, 0.0
    %v78 = vadd.f32 %v76, %v77
    %v79 = vsel %vm67, %v56, 0.0
    %v80 = vadd.f32 %v78, %v79
    %v81 = vsel %vm67, %v58, 0.0
    %v82 = vadd.f32 %v80, %v81
    %83 = vadd.xlane.f32.xlu0 %v82
    %v84 = vpop.xlane.xlu0 %83
    %v85 = vmul.f32 %v84, 0.0009765625
    %v88 = vunpack.c.l.s4 269488144
    %v89 = vunpack.c.0.s8 %v88
    %v90 = vlaneseq
    %v91 = vshrl.u32 %v90, 7
    %v92 = vsub.s32 %v89, %v91
    %v93 = vrot.slane %v85, %v92
    %v95 = vsub.f32 %v21, %v93
    %v96 = vsub.f32 %v22, %v93
    %v97 = vmul.f32 %v95, %v95
    %v98 = vmul.f32 %v96, %v96
    %v101 = vcombine.high %v97, %v97
    %v103 = vunpack.c.l.s4 1983009808
    %v104 = vunpack.c.0.s8 %v103
    %v105 = vlaneseq
    %v106 = vshrl.u32 %v105, 7
    %v107 = vsub.s32 %v104, %v106
    %v108 = vrot.slane %v97, %v107
    %v110 = vunpack.c.l.s4 1983009808
    %v111 = vunpack.c.0.s8 %v110
    %v112 = vlaneseq
    %v113 = vshrl.u32 %v112, 7
    %v114 = vsub.s32 %v111, %v113
    %v115 = vrot.slane %v101, %v114
    %v116 = vcombine.high %v108, %v108
    %v117 = vcombine.high %v115, %v115
    %v118 = vcombine.high %v98, %v98
    %v120 = vunpack.c.l.s4 1983009808
    %v121 = vunpack.c.0.s8 %v120
    %v122 = vlaneseq
    %v123 = vshrl.u32 %v122, 7
    %v124 = vsub.s32 %v121, %v123
    %v125 = vrot.slane %v98, %v124
    %v127 = vunpack.c.l.s4 1983009808
    %v128 = vunpack.c.0.s8 %v127
    %v129 = vlaneseq
    %v130 = vshrl.u32 %v129, 7
    %v131 = vsub.s32 %v128, %v130
    %v132 = vrot.slane %v118, %v131
    %v133 = vcombine.high %v125, %v125
    %v134 = vcombine.high %v132, %v132
    %v143 = vsel %vm67, %v108, 0.0
    %v144 = vsel %vm67, %v116, 0.0
    %v145 = vadd.f32 %v143, %v144
    %v146 = vsel %vm67, %v115, 0.0
    %v147 = vadd.f32 %v145, %v146
    %v148 = vsel %vm67, %v117, 0.0
    %v149 = vadd.f32 %v147, %v148
    %v150 = vsel %vm67, %v125, 0.0
    %v151 = vadd.f32 %v149, %v150
    %v152 = vsel %vm67, %v133, 0.0
    %v153 = vadd.f32 %v151, %v152
    %v154 = vsel %vm67, %v132, 0.0
    %v155 = vadd.f32 %v153, %v154
    %v156 = vsel %vm67, %v134, 0.0
    %v157 = vadd.f32 %v155, %v156
    %158 = vadd.xlane.f32.xlu0 %v157
    %v159 = vpop.xlane.xlu0 %158
    %v160 = vmul.f32 %v159, 0.0009775171
    %v161 = vrsqrt.pop %v160
    %v162 = vmul.f32 %v160, %v161
    %vm163 = vcmp.eq.f32.partialorder %v160, inf
    %v164 = vsel %vm163, %v160, %v162
    %vm165 = vcmp.eq.f32.partialorder %v160, 0.0
    %v166 = vand.u32 %v160, 2147483648
    %v167 = vsel %vm165, %v166, %v164
    %v168 = vadd.f32 %v167, 1e-07
    %v169 = vrcp.pop %v168
    %v172 = vunpack.c.l.s4 269488144
    %v173 = vunpack.c.0.s8 %v172
    %v174 = vlaneseq
    %v175 = vshrl.u32 %v174, 7
    %v176 = vsub.s32 %v173, %v175
    %v177 = vrot.slane %v169, %v176
    %v179 = vmul.f32 %v95, %v177
    %v180 = vmul.f32 %v96, %v177
    %181 = vst [vmem:[#allocation5] sm:$0xff] %v179
    %182 = vst [vmem:[#allocation5 + $0x8] sm:$0xff] %v180
    // Predicated region
    $region10: #{tpu_custom_call.1} parent=1 // pred_check
      _
    $region11: #{tpu_custom_call.1} parent=1 // pred_check_branch
      %184 = sbr.rel (0) target = $region13
    $region12: #{tpu_custom_call.1} parent=1 // pred_region
      %s186 = ssub.s32 256, 256
      %187 = vsyncadd [#allocation4], %s186
      %s189 = sshll.u32 [#allocation5], 4
      %s190 = int_to_ptr.vmem [resolvable:$true] %s189
      %192 = dma.vmem_to_hbm [thread:$0]  %s190, 256, %s1, [#allocation4]
    $region13: #{tpu_custom_call.1} parent=1 // pred_fallthru
      _
    // Predicated region
    $region14: #{tpu_custom_call.1} parent=1 // pred_check
      _
    $region15: #{tpu_custom_call.1} parent=1 // pred_check_branch
      %194 = sbr.rel (0) target = $region17
    $region16: #{tpu_custom_call.1} parent=1 // pred_region
      %195 = dma.done [#allocation4], 256
    $region17: #{tpu_custom_call.1} parent=1 // pred_fallthru
      _
    %196 = vsyncpa [#allocation3], 1
    %197 = vsyncpa [#allocation4], 1

</llo_original>
